<compile_context>
chip_gen: v7x
topology: tpu7x:2x2x1
jax: 0.10.0
libtpu: 0.0.40
codegen_flags: <defaults>
</compile_context>

<pallas_src>
import math

import jax
import jax.numpy as jnp
from jax.experimental import pallas as pl
from jax.experimental.pallas import tpu as pltpu

# ---- small synthetic sizes ----
B, S, H, C = 2, 8, 32, 7          # batch, seq, hidden_size, num_classes
FF = 4 * H                        # feed-forward intermediate
VOCAB = 100
N_SEG = 2
C_PAD = 128                       # lane-dense padded classifier output width
HP = ((H + 127) // 128) * 128     # per-projection width padded to a 128-lane tile boundary


def _layernorm(x, g, b, eps=1e-12):
    m = jnp.mean(x, axis=-1, keepdims=True)
    v = jnp.mean((x - m) ** 2, axis=-1, keepdims=True)
    return (x - m) * jax.lax.rsqrt(v + eps) * g + b


def bert_classifier_kernel(vl_ref, x_ref,
                           wqkv_ref, bqkv_ref,
                           wo_ref, bo_ref, ln1g_ref, ln1b_ref,
                           w1_ref, b1_ref, w2_ref, b2_ref, ln2g_ref, ln2b_ref,
                           wp_ref, bp_ref, wc_ref, bc_ref,
                           out_ref):
    # x: (B, S, H) f32 embedded tokens (residual precision kept in f32).
    x = x_ref[...]
    x2d = x.reshape(B * S, H)                                                # (B*S, H) f32
    x_bf = x2d.astype(jnp.bfloat16)

    # ---- fused Q/K/V projection: one (B*S, H) x (H, 3*HP) MXU push.
    # Each projection occupies its own 128-lane tile, so the slices below are tile-aligned
    # (no cross-lane extracts / relayouts). Padded lanes carry zeros end-to-end.
    qkv = jnp.dot(x_bf, wqkv_ref[...],
                  preferred_element_type=jnp.float32) + bqkv_ref[...]        # (B*S, 3*HP) f32
    q = qkv[:, 0 * HP:1 * HP].reshape(B, S, HP).astype(jnp.bfloat16)
    k = qkv[:, 1 * HP:2 * HP].reshape(B, S, HP).astype(jnp.bfloat16)
    v = qkv[:, 2 * HP:3 * HP].reshape(B, S, HP).astype(jnp.bfloat16)

    # ---- gen_attention_mask, vectorized: additive key bias, 0 if kpos < valid_length else -1e9.
    # Assumes valid_length >= 1 (as the PyTorch gen_attention_mask effectively does).
    vl = vl_ref[...]                                                         # (B, 1) int32
    kpos = jax.lax.broadcasted_iota(jnp.int32, (B, 1, S), 2)                 # (B, 1, S)
    bias = jnp.where(kpos < vl[:, :, None],
                     jnp.float32(0.0), jnp.float32(-1e9))                    # (B, 1, S)

    # ---- single-head self-attention (key-side masking, as in standard BERT) ----
    scale = jnp.float32(1.0 / math.sqrt(H))
    scores = jnp.einsum('bqd,bkd->bqk', q, k,
                        preferred_element_type=jnp.float32) * scale + bias   # (B, S, S) f32

    m = jnp.max(scores, axis=-1, keepdims=True)
    p = jnp.exp(scores - m)                                                  # (B, S, S) f32
    l = jnp.sum(p, axis=-1, keepdims=True)                                   # (B, S, 1) f32
    # flash-style: normalize the (B, S, HP) context instead of the (B, S, S) probabilities.
    ctx = jnp.einsum('bqk,bkd->bqd', p.astype(jnp.bfloat16), v,
                     preferred_element_type=jnp.float32)                     # (B, S, HP) f32
    ctx = ctx * pl.reciprocal(l, approx=True)

    ctx2d = ctx.reshape(B * S, HP).astype(jnp.bfloat16)
    attn_out = jnp.dot(ctx2d, wo_ref[...],
                       preferred_element_type=jnp.float32) + bo_ref[...]     # (B*S, H) f32
    h1 = _layernorm(x2d + attn_out, ln1g_ref[...], ln1b_ref[...])            # (B*S, H) f32

    # ---- only the CLS token feeds the pooler/classifier: run FFN + LN2 of this (last)
    # encoder layer on the CLS rows only -> (B, H) instead of (B*S, H).
    h1_cls = h1.reshape(B, S, H)[:, 0, :]                                    # (B, H) f32

    # TODO(synk): tanh-approximate GELU; HF/PyTorch BERT uses the exact erf GELU (tiny divergence).
    ff = jnp.dot(h1_cls.astype(jnp.bfloat16), w1_ref[...],
                 preferred_element_type=jnp.float32) + b1_ref[...]           # (B, FF) f32
    ff = jax.nn.gelu(ff, approximate=True)
    ff = jnp.dot(ff.astype(jnp.bfloat16), w2_ref[...],
                 preferred_element_type=jnp.float32) + b2_ref[...]           # (B, H) f32
    h2_cls = _layernorm(h1_cls + ff, ln2g_ref[...], ln2b_ref[...])           # (B, H) f32

    # ---- BERT pooler: tanh(Linear(CLS token)) ----
    pooled = jnp.tanh(jnp.dot(h2_cls.astype(jnp.bfloat16), wp_ref[...],
                              preferred_element_type=jnp.float32) + bp_ref[...])  # (B, H) f32

    # TODO(synk): dropout (dr_rate) omitted — module default dr_rate=None (inference identity).

    # ---- classifier: nn.Linear(hidden_size, num_classes), padded to 128 lanes (unmasked store) ----
    logits = jnp.dot(pooled.astype(jnp.bfloat16), wc_ref[...],
                     preferred_element_type=jnp.float32) + bc_ref[...]       # (B, C_PAD) f32
    out_ref[...] = logits


def prepare_params(params):
    """One-time weight prep (fusion / padding / bf16 casts) hoisted out of the forward."""
    bf16 = lambda a: a.astype(jnp.bfloat16)
    pad_lanes = lambda a, n: jnp.pad(a, ((0, 0), (0, n - a.shape[1])))

    # Fused QKV weight/bias, each projection padded to HP output lanes (tile-aligned slices).
    wqkv = bf16(jnp.concatenate(
        [pad_lanes(params[w], HP) for w in ('wq', 'wk', 'wv')], axis=1))     # (H, 3*HP)
    bqkv = jnp.concatenate(
        [pad_lanes(params[b], HP) for b in ('bq', 'bk', 'bv')], axis=1)      # (1, 3*HP) f32
    wo = bf16(jnp.pad(params['wo'], ((0, HP - H), (0, 0))))                  # (HP, H), zero rows
    wc = bf16(pad_lanes(params['wc'], C_PAD))                                # (H, 128)
    bc = pad_lanes(params['bc'], C_PAD)                                      # (1, 128) f32

    kernel_args = (
        wqkv, bqkv,
        wo, params['bo'], params['ln1g'], params['ln1b'],
        bf16(params['w1']), params['b1'], bf16(params['w2']), params['b2'],
        params['ln2g'], params['ln2b'],
        bf16(params['wp']), params['bp'], wc, bc,
    )
    return {'tok_emb': params['tok_emb'], 'seg_emb': params['seg_emb'],
            'pos_emb': params['pos_emb'], 'kernel_args': kernel_args}


@jax.jit
def bert_classifier_forward(token_ids, valid_length, segment_ids, prepared):
    # Glue (plain JAX, fused by XLA under jit): token + segment (token_type) + position embeddings.
    # TODO(synk): at real vocab/seq sizes fuse the gathers into the kernel via scalar prefetch
    # (PrefetchScalarGridSpec + pl.Element row gathers) to avoid the (B,S,H) HBM round trip.
    x = (prepared['tok_emb'][token_ids]
         + prepared['seg_emb'][segment_ids.astype(jnp.int32)]
         + prepared['pos_emb'][None, :token_ids.shape[1], :])                # (B, S, H) f32
    vl = valid_length.astype(jnp.int32).reshape(-1, 1)                       # (B, 1)

    vmem = pl.BlockSpec(memory_space=pltpu.MemorySpace.VMEM)
    n_in = 2 + len(prepared['kernel_args'])

    logits_pad = pl.pallas_call(
        bert_classifier_kernel,
        out_shape=jax.ShapeDtypeStruct((token_ids.shape[0], C_PAD), jnp.float32),
        in_specs=[vmem] * n_in,
        out_specs=vmem,
    )(vl, x, *prepared['kernel_args'])
    return logits_pad[:, :C]                                                 # (B, C)


def init_params(key):
    ks = jax.random.split(key, 12)
    w = lambda k, shape: jax.random.normal(k, shape, jnp.float32) * 0.02
    return {
        'tok_emb': w(ks[0], (VOCAB, H)),
        'seg_emb': w(ks[1], (N_SEG, H)),
        'pos_emb': w(ks[2], (S, H)),
        'wq': w(ks[3], (H, H)), 'bq': jnp.zeros((1, H), jnp.float32),
        'wk': w(ks[4], (H, H)), 'bk': jnp.zeros((1, H), jnp.float32),
        'wv': w(ks[5], (H, H)), 'bv': jnp.zeros((1, H), jnp.float32),
        'wo': w(ks[6], (H, H)), 'bo': jnp.zeros((1, H), jnp.float32),
        'ln1g': jnp.ones((1, H), jnp.float32), 'ln1b': jnp.zeros((1, H), jnp.float32),
        'w1': w(ks[7], (H, FF)), 'b1': jnp.zeros((1, FF), jnp.float32),
        'w2': w(ks[8], (FF, H)), 'b2': jnp.zeros((1, H), jnp.float32),
        'ln2g': jnp.ones((1, H), jnp.float32), 'ln2b': jnp.zeros((1, H), jnp.float32),
        'wp': w(ks[9], (H, H)), 'bp': jnp.zeros((1, H), jnp.float32),
        'wc': w(ks[10], (H, C)), 'bc': jnp.zeros((1, C), jnp.float32),
    }


if __name__ == "__main__":
    key = jax.random.PRNGKey(0)
    pkey, tkey = jax.random.split(key)
    params = init_params(pkey)
    prepared = prepare_params(params)            # one-time fuse/pad/cast (hoisted out of forward)

    token_ids = jax.random.randint(tkey, (B, S), 0, VOCAB, dtype=jnp.int32)
    valid_length = jnp.array([5, 8], dtype=jnp.int32)   # per-example valid token count (>=1)
    segment_ids = jnp.zeros((B, S), dtype=jnp.int32)

    logits = bert_classifier_forward(token_ids, valid_length, segment_ids, prepared)
    logits = jax.block_until_ready(logits)
    assert logits.shape == (B, C) and logits.dtype == jnp.float32
    assert bool(jnp.all(jnp.isfinite(logits)))
    print("KERNEL_OK")
</pallas_src>

<mosaic_0001>
module attributes {stable_mosaic.version = 11 : i64} {
  func.func @bert_classifier_kernel(%arg0: memref<2x1xi32, #tpu.memory_space<vmem>>, %arg1: memref<2x8x32xf32, #tpu.memory_space<vmem>>, %arg2: memref<32x384xbf16, #tpu.memory_space<vmem>>, %arg3: memref<1x384xf32, #tpu.memory_space<vmem>>, %arg4: memref<128x32xbf16, #tpu.memory_space<vmem>>, %arg5: memref<1x32xf32, #tpu.memory_space<vmem>>, %arg6: memref<1x32xf32, #tpu.memory_space<vmem>>, %arg7: memref<1x32xf32, #tpu.memory_space<vmem>>, %arg8: memref<32x128xbf16, #tpu.memory_space<vmem>>, %arg9: memref<1x128xf32, #tpu.memory_space<vmem>>, %arg10: memref<128x32xbf16, #tpu.memory_space<vmem>>, %arg11: memref<1x32xf32, #tpu.memory_space<vmem>>, %arg12: memref<1x32xf32, #tpu.memory_space<vmem>>, %arg13: memref<1x32xf32, #tpu.memory_space<vmem>>, %arg14: memref<32x32xbf16, #tpu.memory_space<vmem>>, %arg15: memref<1x32xf32, #tpu.memory_space<vmem>>, %arg16: memref<32x128xbf16, #tpu.memory_space<vmem>>, %arg17: memref<1x128xf32, #tpu.memory_space<vmem>>, %arg18: memref<2x128xf32, #tpu.memory_space<vmem>>) attributes {dimension_semantics = [], scalar_prefetch = 0 : i64, scratch_operands = 0 : i64, tpu.core_type = #tpu.core_type<tc>} {
    %c0 = arith.constant 0 : index
    %c0_0 = arith.constant 0 : index
    %c0_1 = arith.constant 0 : index
    %0 = vector.load %arg1[%c0, %c0_0, %c0_1] : memref<2x8x32xf32, #tpu.memory_space<vmem>>, vector<2x8x32xf32>
    %1 = vector.shape_cast %0 : vector<2x8x32xf32> to vector<16x32xf32>
    %2 = arith.truncf %1 : vector<16x32xf32> to vector<16x32xbf16>
    %c0_2 = arith.constant 0 : index
    %c0_3 = arith.constant 0 : index
    %3 = vector.load %arg2[%c0_2, %c0_3] : memref<32x384xbf16, #tpu.memory_space<vmem>>, vector<32x384xbf16>
    %cst = arith.constant dense<0.000000e+00> : vector<16x384xf32>
    %4 = tpu.matmul %2, %3, %cst {dimension_numbers = #tpu.dot_dimension_numbers<[1], [0], [0], [1], [0, 0, 1, 1], [], []>} : vector<16x32xbf16>, vector<32x384xbf16>, vector<16x384xf32> -> vector<16x384xf32>
    %c0_4 = arith.constant 0 : index
    %c0_5 = arith.constant 0 : index
    %5 = vector.load %arg3[%c0_4, %c0_5] : memref<1x384xf32, #tpu.memory_space<vmem>>, vector<1x384xf32>
    %6 = vector.broadcast %5 : vector<1x384xf32> to vector<16x384xf32>
    %7 = arith.addf %4, %6 : vector<16x384xf32>
    %8 = vector.extract_strided_slice %7 {offsets = [0, 0], sizes = [16, 128], strides = [1, 1]} : vector<16x384xf32> to vector<16x128xf32>
    %9 = vector.shape_cast %8 : vector<16x128xf32> to vector<2x8x128xf32>
    %10 = arith.truncf %9 : vector<2x8x128xf32> to vector<2x8x128xbf16>
    %11 = vector.extract_strided_slice %7 {offsets = [0, 128], sizes = [16, 128], strides = [1, 1]} : vector<16x384xf32> to vector<16x128xf32>
    %12 = vector.shape_cast %11 : vector<16x128xf32> to vector<2x8x128xf32>
    %13 = arith.truncf %12 : vector<2x8x128xf32> to vector<2x8x128xbf16>
    %14 = vector.extract_strided_slice %7 {offsets = [0, 256], sizes = [16, 128], strides = [1, 1]} : vector<16x384xf32> to vector<16x128xf32>
    %15 = vector.shape_cast %14 : vector<16x128xf32> to vector<2x8x128xf32>
    %16 = arith.truncf %15 : vector<2x8x128xf32> to vector<2x8x128xbf16>
    %c0_6 = arith.constant 0 : index
    %c0_7 = arith.constant 0 : index
    %17 = vector.load %arg0[%c0_6, %c0_7] : memref<2x1xi32, #tpu.memory_space<vmem>>, vector<2x1xi32>
    %18 = tpu.iota {dimensions = array<i32: 2>} : vector<2x1x8xi32>
    %19 = vector.shape_cast %17 : vector<2x1xi32> to vector<2x1x1xi32>
    %20 = vector.broadcast %19 : vector<2x1x1xi32> to vector<2x1x8xi32>
    %21 = arith.cmpi slt, %18, %20 : vector<2x1x8xi32>
    %cst_8 = arith.constant 0.000000e+00 : f32
    %cst_9 = arith.constant -1.000000e+09 : f32
    %22 = vector.broadcast %cst_8 : f32 to vector<2x1x8xf32>
    %23 = vector.broadcast %cst_9 : f32 to vector<2x1x8xf32>
    %24 = arith.select %21, %22, %23 : vector<2x1x8xi1>, vector<2x1x8xf32>
    "tpu.trace_start"() <{level = 10 : i32, message = "bqd,bkd->bqk"}> : () -> ()
    %cst_10 = arith.constant dense<0.000000e+00> : vector<2x8x8xf32>
    %25 = tpu.matmul %10, %13, %cst_10 {dimension_numbers = #tpu.dot_dimension_numbers<[2], [2], [1], [1], [0, 0, 0, 1, 1, 1], [0], [0]>} : vector<2x8x128xbf16>, vector<2x8x128xbf16>, vector<2x8x8xf32> -> vector<2x8x8xf32>
    "tpu.trace_stop"() : () -> ()
    %cst_11 = arith.constant 0.176776692 : f32
    %26 = vector.broadcast %cst_11 : f32 to vector<2x8x8xf32>
    %27 = arith.mulf %25, %26 : vector<2x8x8xf32>
    %28 = vector.broadcast %24 : vector<2x1x8xf32> to vector<2x8x8xf32>
    %29 = arith.addf %27, %28 : vector<2x8x8xf32>
    %cst_12 = arith.constant dense<0xFF800000> : vector<2x8xf32>
    %30 = vector.multi_reduction <maximumf>, %29, %cst_12 [2] : vector<2x8x8xf32> to vector<2x8xf32>
    %31 = vector.shape_cast %30 : vector<2x8xf32> to vector<2x8x1xf32>
    %32 = vector.broadcast %31 : vector<2x8x1xf32> to vector<2x8x8xf32>
    %33 = arith.subf %29, %32 : vector<2x8x8xf32>
    %34 = math.exp %33 : vector<2x8x8xf32>
    %cst_13 = arith.constant dense<0.000000e+00> : vector<2x8xf32>
    %35 = vector.multi_reduction <add>, %34, %cst_13 [2] : vector<2x8x8xf32> to vector<2x8xf32>
    %36 = vector.shape_cast %35 : vector<2x8xf32> to vector<2x8x1xf32>
    %37 = arith.truncf %34 : vector<2x8x8xf32> to vector<2x8x8xbf16>
    "tpu.trace_start"() <{level = 10 : i32, message = "bqk,bkd->bqd"}> : () -> ()
    %cst_14 = arith.constant dense<0.000000e+00> : vector<2x8x128xf32>
    %38 = tpu.matmul %37, %16, %cst_14 {dimension_numbers = #tpu.dot_dimension_numbers<[2], [1], [1], [2], [0, 0, 0, 1, 1, 2], [0], [0]>} : vector<2x8x8xbf16>, vector<2x8x128xbf16>, vector<2x8x128xf32> -> vector<2x8x128xf32>
    "tpu.trace_stop"() : () -> ()
    %39 = tpu.reciprocal %36 {approx = true} : vector<2x8x1xf32> -> vector<2x8x1xf32>
    %40 = vector.broadcast %39 : vector<2x8x1xf32> to vector<2x8x128xf32>
    %41 = arith.mulf %38, %40 : vector<2x8x128xf32>
    %42 = vector.shape_cast %41 : vector<2x8x128xf32> to vector<16x128xf32>
    %43 = arith.truncf %42 : vector<16x128xf32> to vector<16x128xbf16>
    %c0_15 = arith.constant 0 : index
    %c0_16 = arith.constant 0 : index
    %44 = vector.load %arg4[%c0_15, %c0_16] : memref<128x32xbf16, #tpu.memory_space<vmem>>, vector<128x32xbf16>
    %cst_17 = arith.constant dense<0.000000e+00> : vector<16x32xf32>
    %45 = tpu.matmul %43, %44, %cst_17 {dimension_numbers = #tpu.dot_dimension_numbers<[1], [0], [0], [1], [0, 0, 1, 1], [], []>} : vector<16x128xbf16>, vector<128x32xbf16>, vector<16x32xf32> -> vector<16x32xf32>
    %c0_18 = arith.constant 0 : index
    %c0_19 = arith.constant 0 : index
    %46 = vector.load %arg5[%c0_18, %c0_19] : memref<1x32xf32, #tpu.memory_space<vmem>>, vector<1x32xf32>
    %47 = vector.broadcast %46 : vector<1x32xf32> to vector<16x32xf32>
    %48 = arith.addf %45, %47 : vector<16x32xf32>
    %49 = arith.addf %1, %48 : vector<16x32xf32>
    %c0_20 = arith.constant 0 : index
    %c0_21 = arith.constant 0 : index
    %50 = vector.load %arg6[%c0_20, %c0_21] : memref<1x32xf32, #tpu.memory_space<vmem>>, vector<1x32xf32>
    %c0_22 = arith.constant 0 : index
    %c0_23 = arith.constant 0 : index
    %51 = vector.load %arg7[%c0_22, %c0_23] : memref<1x32xf32, #tpu.memory_space<vmem>>, vector<1x32xf32>
    %cst_24 = arith.constant dense<0.000000e+00> : vector<16xf32>
    %52 = vector.multi_reduction <add>, %49, %cst_24 [1] : vector<16x32xf32> to vector<16xf32>
    %53 = vector.shape_cast %52 : vector<16xf32> to vector<16x1xf32>
    %cst_25 = arith.constant 3.200000e+01 : f32
    %54 = vector.broadcast %cst_25 : f32 to vector<16x1xf32>
    %55 = arith.divf %53, %54 : vector<16x1xf32>
    %56 = vector.broadcast %55 : vector<16x1xf32> to vector<16x32xf32>
    %57 = arith.subf %49, %56 : vector<16x32xf32>
    %58 = arith.mulf %57, %57 : vector<16x32xf32>
    %cst_26 = arith.constant dense<0.000000e+00> : vector<16xf32>
    %59 = vector.multi_reduction <add>, %58, %cst_26 [1] : vector<16x32xf32> to vector<16xf32>
    %60 = vector.shape_cast %59 : vector<16xf32> to vector<16x1xf32>
    %cst_27 = arith.constant 3.200000e+01 : f32
    %61 = vector.broadcast %cst_27 : f32 to vector<16x1xf32>
    %62 = arith.divf %60, %61 : vector<16x1xf32>
    %63 = vector.broadcast %55 : vector<16x1xf32> to vector<16x32xf32>
    %64 = arith.subf %49, %63 : vector<16x32xf32>
    %cst_28 = arith.constant 9.99999996E-13 : f32
    %65 = vector.broadcast %cst_28 : f32 to vector<16x1xf32>
    %66 = arith.addf %62, %65 : vector<16x1xf32>
    %67 = math.rsqrt %66 : vector<16x1xf32>
    %68 = vector.broadcast %67 : vector<16x1xf32> to vector<16x32xf32>
    %69 = arith.mulf %64, %68 : vector<16x32xf32>
    %70 = vector.broadcast %50 : vector<1x32xf32> to vector<16x32xf32>
    %71 = arith.mulf %69, %70 : vector<16x32xf32>
    %72 = vector.broadcast %51 : vector<1x32xf32> to vector<16x32xf32>
    %73 = arith.addf %71, %72 : vector<16x32xf32>
    %74 = vector.shape_cast %73 : vector<16x32xf32> to vector<2x8x32xf32>
    %75 = vector.extract_strided_slice %74 {offsets = [0, 0, 0], sizes = [2, 1, 32], strides = [1, 1, 1]} : vector<2x8x32xf32> to vector<2x1x32xf32>
    %76 = vector.shape_cast %75 : vector<2x1x32xf32> to vector<2x32xf32>
    %77 = arith.truncf %76 : vector<2x32xf32> to vector<2x32xbf16>
    %c0_29 = arith.constant 0 : index
    %c0_30 = arith.constant 0 : index
    %78 = vector.load %arg8[%c0_29, %c0_30] : memref<32x128xbf16, #tpu.memory_space<vmem>>, vector<32x128xbf16>
    %cst_31 = arith.constant dense<0.000000e+00> : vector<2x128xf32>
    %79 = tpu.matmul %77, %78, %cst_31 {dimension_numbers = #tpu.dot_dimension_numbers<[1], [0], [0], [1], [0, 0, 1, 1], [], []>} : vector<2x32xbf16>, vector<32x128xbf16>, vector<2x128xf32> -> vector<2x128xf32>
    %c0_32 = arith.constant 0 : index
    %c0_33 = arith.constant 0 : index
    %80 = vector.load %arg9[%c0_32, %c0_33] : memref<1x128xf32, #tpu.memory_space<vmem>>, vector<1x128xf32>
    %81 = vector.broadcast %80 : vector<1x128xf32> to vector<2x128xf32>
    %82 = arith.addf %79, %81 : vector<2x128xf32>
    %83 = arith.mulf %82, %82 : vector<2x128xf32>
    %84 = arith.mulf %82, %83 : vector<2x128xf32>
    %cst_34 = arith.constant 4.471500e-02 : f32
    %85 = vector.broadcast %cst_34 : f32 to vector<2x128xf32>
    %86 = arith.mulf %85, %84 : vector<2x128xf32>
    %87 = arith.addf %82, %86 : vector<2x128xf32>
    %cst_35 = arith.constant 0.797884583 : f32
    %88 = vector.broadcast %cst_35 : f32 to vector<2x128xf32>
    %89 = arith.mulf %88, %87 : vector<2x128xf32>
    %90 = math.tanh %89 : vector<2x128xf32>
    %cst_36 = arith.constant 1.000000e+00 : f32
    %91 = vector.broadcast %cst_36 : f32 to vector<2x128xf32>
    %92 = arith.addf %91, %90 : vector<2x128xf32>
    %cst_37 = arith.constant 5.000000e-01 : f32
    %93 = vector.broadcast %cst_37 : f32 to vector<2x128xf32>
    %94 = arith.mulf %93, %92 : vector<2x128xf32>
    %95 = arith.mulf %82, %94 : vector<2x128xf32>
    %96 = arith.truncf %95 : vector<2x128xf32> to vector<2x128xbf16>
    %c0_38 = arith.constant 0 : index
    %c0_39 = arith.constant 0 : index
    %97 = vector.load %arg10[%c0_38, %c0_39] : memref<128x32xbf16, #tpu.memory_space<vmem>>, vector<128x32xbf16>
    %cst_40 = arith.constant dense<0.000000e+00> : vector<2x32xf32>
    %98 = tpu.matmul %96, %97, %cst_40 {dimension_numbers = #tpu.dot_dimension_numbers<[1], [0], [0], [1], [0, 0, 1, 1], [], []>} : vector<2x128xbf16>, vector<128x32xbf16>, vector<2x32xf32> -> vector<2x32xf32>
    %c0_41 = arith.constant 0 : index
    %c0_42 = arith.constant 0 : index
    %99 = vector.load %arg11[%c0_41, %c0_42] : memref<1x32xf32, #tpu.memory_space<vmem>>, vector<1x32xf32>
    %100 = vector.broadcast %99 : vector<1x32xf32> to vector<2x32xf32>
    %101 = arith.addf %98, %100 : vector<2x32xf32>
    %102 = arith.addf %76, %101 : vector<2x32xf32>
    %c0_43 = arith.constant 0 : index
    %c0_44 = arith.constant 0 : index
    %103 = vector.load %arg12[%c0_43, %c0_44] : memref<1x32xf32, #tpu.memory_space<vmem>>, vector<1x32xf32>
    %c0_45 = arith.constant 0 : index
    %c0_46 = arith.constant 0 : index
    %104 = vector.load %arg13[%c0_45, %c0_46] : memref<1x32xf32, #tpu.memory_space<vmem>>, vector<1x32xf32>
    %cst_47 = arith.constant dense<0.000000e+00> : vector<2xf32>
    %105 = vector.multi_reduction <add>, %102, %cst_47 [1] : vector<2x32xf32> to vector<2xf32>
    %106 = vector.shape_cast %105 : vector<2xf32> to vector<2x1xf32>
    %cst_48 = arith.constant 3.200000e+01 : f32
    %107 = vector.broadcast %cst_48 : f32 to vector<2x1xf32>
    %108 = arith.divf %106, %107 : vector<2x1xf32>
    %109 = vector.broadcast %108 : vector<2x1xf32> to vector<2x32xf32>
    %110 = arith.subf %102, %109 : vector<2x32xf32>
    %111 = arith.mulf %110, %110 : vector<2x32xf32>
    %cst_49 = arith.constant dense<0.000000e+00> : vector<2xf32>
    %112 = vector.multi_reduction <add>, %111, %cst_49 [1] : vector<2x32xf32> to vector<2xf32>
    %113 = vector.shape_cast %112 : vector<2xf32> to vector<2x1xf32>
    %cst_50 = arith.constant 3.200000e+01 : f32
    %114 = vector.broadcast %cst_50 : f32 to vector<2x1xf32>
    %115 = arith.divf %113, %114 : vector<2x1xf32>
    %116 = vector.broadcast %108 : vector<2x1xf32> to vector<2x32xf32>
    %117 = arith.subf %102, %116 : vector<2x32xf32>
    %cst_51 = arith.constant 9.99999996E-13 : f32
    %118 = vector.broadcast %cst_51 : f32 to vector<2x1xf32>
    %119 = arith.addf %115, %118 : vector<2x1xf32>
    %120 = math.rsqrt %119 : vector<2x1xf32>
    %121 = vector.broadcast %120 : vector<2x1xf32> to vector<2x32xf32>
    %122 = arith.mulf %117, %121 : vector<2x32xf32>
    %123 = vector.broadcast %103 : vector<1x32xf32> to vector<2x32xf32>
    %124 = arith.mulf %122, %123 : vector<2x32xf32>
    %125 = vector.broadcast %104 : vector<1x32xf32> to vector<2x32xf32>
    %126 = arith.addf %124, %125 : vector<2x32xf32>
    %127 = arith.truncf %126 : vector<2x32xf32> to vector<2x32xbf16>
    %c0_52 = arith.constant 0 : index
    %c0_53 = arith.constant 0 : index
    %128 = vector.load %arg14[%c0_52, %c0_53] : memref<32x32xbf16, #tpu.memory_space<vmem>>, vector<32x32xbf16>
    %cst_54 = arith.constant dense<0.000000e+00> : vector<2x32xf32>
    %129 = tpu.matmul %127, %128, %cst_54 {dimension_numbers = #tpu.dot_dimension_numbers<[1], [0], [0], [1], [0, 0, 1, 1], [], []>} : vector<2x32xbf16>, vector<32x32xbf16>, vector<2x32xf32> -> vector<2x32xf32>
    %c0_55 = arith.constant 0 : index
    %c0_56 = arith.constant 0 : index
    %130 = vector.load %arg15[%c0_55, %c0_56] : memref<1x32xf32, #tpu.memory_space<vmem>>, vector<1x32xf32>
    %131 = vector.broadcast %130 : vector<1x32xf32> to vector<2x32xf32>
    %132 = arith.addf %129, %131 : vector<2x32xf32>
    %133 = math.tanh %132 : vector<2x32xf32>
    %134 = arith.truncf %133 : vector<2x32xf32> to vector<2x32xbf16>
    %c0_57 = arith.constant 0 : index
    %c0_58 = arith.constant 0 : index
    %135 = vector.load %arg16[%c0_57, %c0_58] : memref<32x128xbf16, #tpu.memory_space<vmem>>, vector<32x128xbf16>
    %cst_59 = arith.constant dense<0.000000e+00> : vector<2x128xf32>
    %136 = tpu.matmul %134, %135, %cst_59 {dimension_numbers = #tpu.dot_dimension_numbers<[1], [0], [0], [1], [0, 0, 1, 1], [], []>} : vector<2x32xbf16>, vector<32x128xbf16>, vector<2x128xf32> -> vector<2x128xf32>
    %c0_60 = arith.constant 0 : index
    %c0_61 = arith.constant 0 : index
    %137 = vector.load %arg17[%c0_60, %c0_61] : memref<1x128xf32, #tpu.memory_space<vmem>>, vector<1x128xf32>
    %138 = vector.broadcast %137 : vector<1x128xf32> to vector<2x128xf32>
    %139 = arith.addf %136, %138 : vector<2x128xf32>
    %c0_62 = arith.constant 0 : index
    %c0_63 = arith.constant 0 : index
    %140 = vector.load %arg18[%c0_62, %c0_63] : memref<2x128xf32, #tpu.memory_space<vmem>>, vector<2x128xf32>
    tpu.vector_store %arg18[%c0_62, %c0_63], %139 {strides = array<i32>} : memref<2x128xf32, #tpu.memory_space<vmem>>, vector<2x128xf32>,
    return
  }
}

</mosaic_0001>

<llo_original>
// kernel: bert_classifier_forward.1
$region0: #{bert_classifier_forward.1}
  #allocation0 [shape = 'u32[]', space=smem, size = 0x4, offset = 0x4, fixed_abs, tag = 'smem constant byte address 0x4 - core index']
  #allocation1 [shape = 'u32[144,128]{1,0:T(1,128)}', space=vmem, size = 0x12000, scoped, tag = 'internal scratch']
  %s0 = inlined_call_operand.vmem [shape: s32[2,1], index: 0, kind: input, shape index: {}]
  %s1 = inlined_call_operand.vmem [shape: f32[2,8,32], index: 1, kind: input, shape index: {}]
  %s2 = inlined_call_operand.vmem [shape: bf16[32,384], index: 2, kind: input, shape index: {}]
  %s3 = inlined_call_operand.vmem [shape: f32[1,384], index: 3, kind: input, shape index: {}]
  %s4 = inlined_call_operand.vmem [shape: bf16[128,32], index: 4, kind: input, shape index: {}]
  %s5 = inlined_call_operand.vmem [shape: f32[1,32], index: 5, kind: input, shape index: {}]
  %s6 = inlined_call_operand.vmem [shape: f32[1,32], index: 6, kind: input, shape index: {}]
  %s7 = inlined_call_operand.vmem [shape: f32[1,32], index: 7, kind: input, shape index: {}]
  %s8 = inlined_call_operand.vmem [shape: bf16[32,128], index: 8, kind: input, shape index: {}]
  %s9 = inlined_call_operand.vmem [shape: f32[1,128], index: 9, kind: input, shape index: {}]
  %s10 = inlined_call_operand.vmem [shape: bf16[128,32], index: 10, kind: input, shape index: {}]
  %s11 = inlined_call_operand.vmem [shape: f32[1,32], index: 11, kind: input, shape index: {}]
  %s12 = inlined_call_operand.vmem [shape: f32[1,32], index: 12, kind: input, shape index: {}]
  %s13 = inlined_call_operand.vmem [shape: f32[1,32], index: 13, kind: input, shape index: {}]
  %s14 = inlined_call_operand.vmem [shape: bf16[32,32], index: 14, kind: input, shape index: {}]
  %s15 = inlined_call_operand.vmem [shape: f32[1,32], index: 15, kind: input, shape index: {}]
  %s16 = inlined_call_operand.vmem [shape: bf16[32,128], index: 16, kind: input, shape index: {}]
  %s17 = inlined_call_operand.vmem [shape: f32[1,128], index: 17, kind: input, shape index: {}]
  %s18 = inlined_call_operand.hbm [shape: f32[2,128], index: 18, kind: output, shape index: {}]
  %s19 = sld [smem:[#allocation0]]
  $region82: #{bert_classifier_forward.1} parent=0
    _
  %s21 = ssub.s32 1, %s19
  %s22 = scalar_select 0, %s21, %s19
  $region1: #{bert_classifier_forward.1} parent=0
    #allocation2 [shape = 'u8[1024]{0}', space=vmem, size = 0x400, scoped, tag = 'output window, operand 0, single buffered']
    #allocation3 [shape = 's32[1]{0}', space=sflag, size = 0x4, scoped, tag = 'scoped memory for bert_classifier_forward.1']
    %23 = vsyncpa [#allocation3], 0
    // Predicated region
    $region2: #{bert_classifier_forward.1} parent=1 // pred_check
      _
    $region3: #{bert_classifier_forward.1} parent=1 // pred_check_branch
      %25 = sbr.rel (0) target = $region5
    $region4: #{bert_classifier_forward.1} parent=1 // pred_region
      _
    $region5: #{bert_classifier_forward.1} parent=1 // pred_fallthru
      _
    // Predicated region
    $region6: #{bert_classifier_forward.1} parent=1 // pred_check
      _
    $region7: #{bert_classifier_forward.1} parent=1 // pred_check_branch
      %27 = sbr.rel (0) target = $region9
    $region8: #{bert_classifier_forward.1} parent=1 // pred_region
      _
    $region9: #{bert_classifier_forward.1} parent=1 // pred_fallthru
      _
    // Predicated region
    $region10: #{bert_classifier_forward.1} parent=1 // pred_check
      _
    $region11: #{bert_classifier_forward.1} parent=1 // pred_check_branch
      %29 = sbr.rel (0) target = $region13
    $region12: #{bert_classifier_forward.1} parent=1 // pred_region
      _
    $region13: #{bert_classifier_forward.1} parent=1 // pred_fallthru
      _
    // Predicated region
    $region14: #{bert_classifier_forward.1} parent=1 // pred_check
      _
    $region15: #{bert_classifier_forward.1} parent=1 // pred_check_branch
      %31 = sbr.rel (0) target = $region17
    $region16: #{bert_classifier_forward.1} parent=1 // pred_region
      _
    $region17: #{bert_classifier_forward.1} parent=1 // pred_fallthru
      _
    // Predicated region
    $region18: #{bert_classifier_forward.1} parent=1 // pred_check
      _
    $region19: #{bert_classifier_forward.1} parent=1 // pred_check_branch
      %33 = sbr.rel (0) target = $region21
    $region20: #{bert_classifier_forward.1} parent=1 // pred_region
      _
    $region21: #{bert_classifier_forward.1} parent=1 // pred_fallthru
      _
    // Predicated region
    $region22: #{bert_classifier_forward.1} parent=1 // pred_check
      _
    $region23: #{bert_classifier_forward.1} parent=1 // pred_check_branch
      %35 = sbr.rel (0) target = $region25
    $region24: #{bert_classifier_forward.1} parent=1 // pred_region
      _
    $region25: #{bert_classifier_forward.1} parent=1 // pred_fallthru
      _
    // Predicated region
    $region26: #{bert_classifier_forward.1} parent=1 // pred_check
      _
    $region27: #{bert_classifier_forward.1} parent=1 // pred_check_branch
      %37 = sbr.rel (0) target = $region29
    $region28: #{bert_classifier_forward.1} parent=1 // pred_region
      _
    $region29: #{bert_classifier_forward.1} parent=1 // pred_fallthru
      _
    // Predicated region
    $region30: #{bert_classifier_forward.1} parent=1 // pred_check
      _
    $region31: #{bert_classifier_forward.1} parent=1 // pred_check_branch
      %39 = sbr.rel (0) target = $region33
    $region32: #{bert_classifier_forward.1} parent=1 // pred_region
      _
    $region33: #{bert_classifier_forward.1} parent=1 // pred_fallthru
      _
    // Predicated region
    $region34: #{bert_classifier_forward.1} parent=1 // pred_check
      _
    $region35: #{bert_classifier_forward.1} parent=1 // pred_check_branch
      %41 = sbr.rel (0) target = $region37
    $region36: #{bert_classifier_forward.1} parent=1 // pred_region
      _
    $region37: #{bert_classifier_forward.1} parent=1 // pred_fallthru
      _
    // Predicated region
    $region38: #{bert_classifier_forward.1} parent=1 // pred_check
      _
    $region39: #{bert_classifier_forward.1} parent=1 // pred_check_branch
      %43 = sbr.rel (0) target = $region41
    $region40: #{bert_classifier_forward.1} parent=1 // pred_region
      _
    $region41: #{bert_classifier_forward.1} parent=1 // pred_fallthru
      _
    // Predicated region
    $region42: #{bert_classifier_forward.1} parent=1 // pred_check
      _
    $region43: #{bert_classifier_forward.1} parent=1 // pred_check_branch
      %45 = sbr.rel (0) target = $region45
    $region44: #{bert_classifier_forward.1} parent=1 // pred_region
      _
    $region45: #{bert_classifier_forward.1} parent=1 // pred_fallthru
      _
    // Predicated region
    $region46: #{bert_classifier_forward.1} parent=1 // pred_check
      _
    $region47: #{bert_classifier_forward.1} parent=1 // pred_check_branch
      %47 = sbr.rel (0) target = $region49
    $region48: #{bert_classifier_forward.1} parent=1 // pred_region
      _
    $region49: #{bert_classifier_forward.1} parent=1 // pred_fallthru
      _
    // Predicated region
    $region50: #{bert_classifier_forward.1} parent=1 // pred_check
      _
    $region51: #{bert_classifier_forward.1} parent=1 // pred_check_branch
      %49 = sbr.rel (0) target = $region53
    $region52: #{bert_classifier_forward.1} parent=1 // pred_region
      _
    $region53: #{bert_classifier_forward.1} parent=1 // pred_fallthru
      _
    // Predicated region
    $region54: #{bert_classifier_forward.1} parent=1 // pred_check
      _
    $region55: #{bert_classifier_forward.1} parent=1 // pred_check_branch
      %51 = sbr.rel (0) target = $region57
    $region56: #{bert_classifier_forward.1} parent=1 // pred_region
      _
    $region57: #{bert_classifier_forward.1} parent=1 // pred_fallthru
      _
    // Predicated region
    $region58: #{bert_classifier_forward.1} parent=1 // pred_check
      _
    $region59: #{bert_classifier_forward.1} parent=1 // pred_check_branch
      %53 = sbr.rel (0) target = $region61
    $region60: #{bert_classifier_forward.1} parent=1 // pred_region
      _
    $region61: #{bert_classifier_forward.1} parent=1 // pred_fallthru
      _
    // Predicated region
    $region62: #{bert_classifier_forward.1} parent=1 // pred_check
      _
    $region63: #{bert_classifier_forward.1} parent=1 // pred_check_branch
      %55 = sbr.rel (0) target = $region65
    $region64: #{bert_classifier_forward.1} parent=1 // pred_region
      _
    $region65: #{bert_classifier_forward.1} parent=1 // pred_fallthru
      _
    // Predicated region
    $region66: #{bert_classifier_forward.1} parent=1 // pred_check
      _
    $region67: #{bert_classifier_forward.1} parent=1 // pred_check_branch
      %57 = sbr.rel (0) target = $region69
    $region68: #{bert_classifier_forward.1} parent=1 // pred_region
      _
    $region69: #{bert_classifier_forward.1} parent=1 // pred_fallthru
      _
    // Predicated region
    $region70: #{bert_classifier_forward.1} parent=1 // pred_check
      _
    $region71: #{bert_classifier_forward.1} parent=1 // pred_check_branch
      %59 = sbr.rel (0) target = $region73
    $region72: #{bert_classifier_forward.1} parent=1 // pred_region
      _
    $region73: #{bert_classifier_forward.1} parent=1 // pred_fallthru
      _
    %v61 = vld [vmem:[%s1] sm:$0xff]
    %v62 = vld [vmem:[%s1 + $0x8] sm:$0xff]
    %v63 = vpack.c.bf16 %v62, %v61
    %v64 = vld [vmem:[%s2] sm:$0xff]
    %v65 = vld [vmem:[%s2 + $0x8] sm:$0xf]
    %v66 = vld [vmem:[%s2 + $0xc] sm:$0xff]
    %v67 = vld [vmem:[%s2 + $0x14] sm:$0xf]
    %v68 = vld [vmem:[%s2 + $0x18] sm:$0xff]
    %v69 = vld [vmem:[%s2 + $0x20] sm:$0xf]
    %v70 = vld [vmem:[%s2 + $0x24] sm:$0xff]
    %v71 = vld [vmem:[%s2 + $0x2c] sm:$0xf]
    %v72 = vld [vmem:[%s3] sm:$0x7]
    %v74 = vlaneseq
    %v75 = vshrl.u32 %v74, 7
    %v76 = vsub.s32 0, %v75
    %v77 = vrot.slane %v72, %v76
    %v78 = vlaneseq
    %v79 = vshrl.u32 %v78, 7
    %v80 = vsub.s32 1, %v79
    %v81 = vrot.slane %v72, %v80
    %v82 = vlaneseq
    %v83 = vshrl.u32 %v82, 7
    %v84 = vsub.s32 2, %v83
    %v85 = vrot.slane %v72, %v84
    %v97 = vunpack.c.l.b16 %v64
    %v98 = vunpack.c.h.b16 %v64
    %v99 = vunpack.c.l.b16 %v65
    %v100 = vunpack.c.l.b16 %v66
    %v101 = vunpack.c.h.b16 %v66
    %v102 = vunpack.c.l.b16 %v67
    %v103 = vunpack.c.l.b16 %v68
    %v104 = vunpack.c.h.b16 %v68
    %v105 = vunpack.c.l.b16 %v69
    %v106 = vunpack.c.l.b16 %v70
    %v107 = vunpack.c.h.b16 %v70
    %v108 = vunpack.c.l.b16 %v71
    %v109 = vpack.c.b16 %v100, %v97
    %v110 = vpack.c.b16 %v101, %v98
    %v111 = vpack.c.b16 %v102, %v99
    %v112 = vpack.c.b16 %v106, %v103
    %v113 = vpack.c.b16 %v107, %v104
    %v114 = vpack.c.b16 %v108, %v105
    %vm121 = vcmask 261120
    %v123 = vsel %vm121, %v63, 0
    %125 = vmatprep.subr.bf16.mxu0 %v110
    %126 = vmatpush1.bf16.msra.mxu0 %v109
    %127 = vmatprep.subr.bf16.mxu0 %v113
    %128 = vmatpush1.bf16.msra.mxu0 %v112
    %129 = vmatprep.subr.bf16.mxu0 0
    %130 = vmatpush1.bf16.msra.mxu0 0
    %131 = vmatprep.subr.bf16.mxu0 0
    %132 = vmatpush1.bf16.msra.mxu0 0
    %133 = vmatprep.subr.bf16.mxu0 0
    %134 = vmatpush1.bf16.msra.mxu0 0
    %135 = vmatprep.subr.bf16.mxu0 0
    %136 = vmatpush1.bf16.msra.mxu0 0
    %137 = vmatprep.subr.bf16.mxu0 0
    %138 = vmatpush1.bf16.msra.mxu0 0
    %139 = vmatprep.subr.bf16.mxu0 0
    %140 = vmatpush1.bf16.msra.mxu0 0
    %141 = vmatprep.subr.bf16.mxu0 0
    %142 = vmatpush1.bf16.msra.mxu0 0
    %143 = vmatprep.subr.bf16.mxu0 0
    %144 = vmatpush1.bf16.msra.mxu0 0
    %145 = vmatprep.subr.bf16.mxu0 0
    %146 = vmatpush1.bf16.msra.mxu0 0
    %147 = vmatprep.subr.bf16.mxu0 0
    %148 = vmatpush1.bf16.msra.mxu0 0
    %149 = vmatprep.subr.bf16.mxu0 0
    %150 = vmatpush1.bf16.msra.mxu0 0
    %151 = vmatprep.subr.bf16.mxu0 0
    %152 = vmatpush1.bf16.msra.mxu0 0
    %153 = vmatprep.subr.bf16.mxu0 0
    %154 = vmatpush1.bf16.msra.mxu0 0
    %155 = vmatprep.subr.bf16.mxu0 0
    %156 = vmatpush1.bf16.msra.mxu0 0
    %157 = vmatprep.mubr.bf16.mxu0 0
    %158 = vmatmul.mubr.bf16.gmra.mrb[0].mxu0 %v123
    %v159 = vpop.f32.mrb[0].mxu0
    %v160 = vadd.f32 %v77, %v159
    %v161 = vpop.f32.mrb[0].mxu0
    %v162 = vadd.f32 %v81, %v161
    %v163 = vpop.f32.mrb[0].mxu0
    %v164 = vadd.f32 %v77, %v163
    %v165 = vpop.f32.mrb[0].mxu0
    %v166 = vadd.f32 %v81, %v165
    %167 = vdwg.mxu0
    %168 = vmatprep.subr.bf16.mxu0 0
    %169 = vmatpush1.bf16.msra.mxu0 %v111
    %170 = vmatprep.subr.bf16.mxu0 0
    %171 = vmatpush1.bf16.msra.mxu0 %v114
    %172 = vmatprep.subr.bf16.mxu0 0
    %173 = vmatpush1.bf16.msra.mxu0 0
    %174 = vmatprep.subr.bf16.mxu0 0
    %175 = vmatpush1.bf16.msra.mxu0 0
    %176 = vmatprep.subr.bf16.mxu0 0
    %177 = vmatpush1.bf16.msra.mxu0 0
    %178 = vmatprep.subr.bf16.mxu0 0
    %179 = vmatpush1.bf16.msra.mxu0 0
    %180 = vmatprep.subr.bf16.mxu0 0
    %181 = vmatpush1.bf16.msra.mxu0 0
    %182 = vmatprep.subr.bf16.mxu0 0
    %183 = vmatpush1.bf16.msra.mxu0 0
    %184 = vmatprep.subr.bf16.mxu0 0
    %185 = vmatpush1.bf16.msra.mxu0 0
    %186 = vmatprep.subr.bf16.mxu0 0
    %187 = vmatpush1.bf16.msra.mxu0 0
    %188 = vmatprep.subr.bf16.mxu0 0
    %189 = vmatpush1.bf16.msra.mxu0 0
    %190 = vmatprep.subr.bf16.mxu0 0
    %191 = vmatpush1.bf16.msra.mxu0 0
    %192 = vmatprep.subr.bf16.mxu0 0
    %193 = vmatpush1.bf16.msra.mxu0 0
    %194 = vmatprep.subr.bf16.mxu0 0
    %195 = vmatpush1.bf16.msra.mxu0 0
    %196 = vmatprep.subr.bf16.mxu0 0
    %197 = vmatpush1.bf16.msra.mxu0 0
    %198 = vmatprep.subr.bf16.mxu0 0
    %199 = vmatpush1.bf16.msra.mxu0 0
    %200 = vmatprep.mubr.bf16.mxu0 0
    %201 = vmatmul.mubr.bf16.gmra.mrb[0].mxu0 %v123
    %v202 = vpop.f32.mrb[0].mxu0
    %v203 = vadd.f32 %v85, %v202
    %v204 = vpop.f32.mrb[0].mxu0
    %v205 = vpop.f32.mrb[0].mxu0
    %v206 = vadd.f32 %v85, %v205
    %v207 = vpop.f32.mrb[0].mxu0
    %208 = vdwg.mxu0
    %v209 = vpack.c.bf16 %v160, %v160
    %v210 = vpack.c.bf16 %v164, %v164
    %v211 = vpack.c.bf16 %v162, %v162
    %v212 = vpack.c.bf16 %v166, %v166
    %v213 = vpack.c.bf16 %v203, %v203
    %v214 = vpack.c.bf16 %v206, %v206
    %v215 = vld [vmem:[%s0] sm:$0x3]
    %v216 = vlaneseq
    %v217 = vand.u32 %v216, 127
    %v219 = vunpack.c.l.s4 1966171168
    %v220 = vunpack.c.0.s8 %v219
    %v221 = vlaneseq
    %v222 = vshrl.u32 %v221, 7
    %v223 = vsub.s32 %v220, %v222
    %v224 = vrot.slane %v215, %v223
    %v225 = vcombine.high %v224, %v224
    %v227 = vunpack.c.l.s4 1966171168
    %v228 = vunpack.c.0.s8 %v227
    %v229 = vlaneseq
    %v230 = vshrl.u32 %v229, 7
    %v231 = vsub.s32 %v228, %v230
    %v232 = vrot.slane %v224, %v231
    %v234 = vunpack.c.l.s4 1966171168
    %v235 = vunpack.c.0.s8 %v234
    %v236 = vlaneseq
    %v237 = vshrl.u32 %v236, 7
    %v238 = vsub.s32 %v235, %v237
    %v239 = vrot.slane %v225, %v238
    %240 = vset.pattern.permute.xlu0 0
    %241 = vperm.xlu0 %240, %v232
    %v242 = vpop.permute.xlu0 %241
    %v243 = vlaneseq
    %v244 = vshrl.u32 %v243, 7
    %v245 = vsub.s32 0, %v244
    %v246 = vrot.slane %v242, %v245
    %247 = vset.pattern.permute.xlu0 0
    %248 = vperm.xlu0 %247, %v239
    %v249 = vpop.permute.xlu0 %248
    %v250 = vlaneseq
    %v251 = vshrl.u32 %v250, 7
    %v252 = vsub.s32 0, %v251
    %v253 = vrot.slane %v249, %v252
    %vm254 = vcmp.lt.s32.totalorder %v217, %v246
    %vm255 = vcmp.lt.s32.totalorder %v217, %v253
    %v256 = vsel %vm254, 0.0, -1e+09
    %v257 = vsel %vm255, 0.0, -1e+09
    %258 = vmatprep.subr.bf16.mxu0 0
    %259 = vmatpush1.bf16.xpose.msra.mxu0 %v211
    %260 = vmatprep.subr.bf16.mxu0 0
    %261 = vmatpush1.bf16.xpose.msra.mxu0 0
    %262 = vmatprep.subr.bf16.mxu0 0
    %263 = vmatpush1.bf16.xpose.msra.mxu0 0
    %264 = vmatprep.subr.bf16.mxu0 0
    %265 = vmatpush1.bf16.xpose.msra.mxu0 0
    %266 = vmatprep.subr.bf16.mxu0 0
    %267 = vmatpush1.bf16.xpose.msra.mxu0 0
    %268 = vmatprep.subr.bf16.mxu0 0
    %269 = vmatpush1.bf16.xpose.msra.mxu0 0
    %270 = vmatprep.subr.bf16.mxu0 0
    %271 = vmatpush1.bf16.xpose.msra.mxu0 0
    %272 = vmatprep.subr.bf16.mxu0 0
    %273 = vmatpush1.bf16.xpose.msra.mxu0 0
    %274 = vmatprep.subr.bf16.mxu0 0
    %275 = vmatpush1.bf16.xpose.msra.mxu0 0
    %276 = vmatprep.subr.bf16.mxu0 0
    %277 = vmatpush1.bf16.xpose.msra.mxu0 0
    %278 = vmatprep.subr.bf16.mxu0 0
    %279 = vmatpush1.bf16.xpose.msra.mxu0 0
    %280 = vmatprep.subr.bf16.mxu0 0
    %281 = vmatpush1.bf16.xpose.msra.mxu0 0
    %282 = vmatprep.subr.bf16.mxu0 0
    %283 = vmatpush1.bf16.xpose.msra.mxu0 0
    %284 = vmatprep.subr.bf16.mxu0 0
    %285 = vmatpush1.bf16.xpose.msra.mxu0 0
    %286 = vmatprep.subr.bf16.mxu0 0
    %287 = vmatpush1.bf16.xpose.msra.mxu0 0
    %288 = vmatprep.subr.bf16.mxu0 0
    %289 = vmatpush1.bf16.xpose.msra.mxu0 0
    %290 = vmatprep.mubr.bf16.mxu0 0
    %291 = vmatmul.mubr.bf16.gmra.mrb[0].mxu0 %v209
    %v292 = vpop.f32.mrb[0].mxu0
    %v293 = vadd.f32 0.0, %v292
    %v294 = vpop.f32.mrb[0].mxu0
    %v295 = vpop.f32.mrb[0].mxu0
    %v296 = vpop.f32.mrb[0].mxu0
    %297 = vdwg.mxu0
    %298 = vmatprep.subr.bf16.mxu0 0
    %299 = vmatpush1.bf16.xpose.msra.mxu0 %v212
    %300 = vmatprep.subr.bf16.mxu0 0
    %301 = vmatpush1.bf16.xpose.msra.mxu0 0
    %302 = vmatprep.subr.bf16.mxu0 0
    %303 = vmatpush1.bf16.xpose.msra.mxu0 0
    %304 = vmatprep.subr.bf16.mxu0 0
    %305 = vmatpush1.bf16.xpose.msra.mxu0 0
    %306 = vmatprep.subr.bf16.mxu0 0
    %307 = vmatpush1.bf16.xpose.msra.mxu0 0
    %308 = vmatprep.subr.bf16.mxu0 0
    %309 = vmatpush1.bf16.xpose.msra.mxu0 0
    %310 = vmatprep.subr.bf16.mxu0 0
    %311 = vmatpush1.bf16.xpose.msra.mxu0 0
    %312 = vmatprep.subr.bf16.mxu0 0
    %313 = vmatpush1.bf16.xpose.msra.mxu0 0
    %314 = vmatprep.subr.bf16.mxu0 0
    %315 = vmatpush1.bf16.xpose.msra.mxu0 0
    %316 = vmatprep.subr.bf16.mxu0 0
    %317 = vmatpush1.bf16.xpose.msra.mxu0 0
    %318 = vmatprep.subr.bf16.mxu0 0
    %319 = vmatpush1.bf16.xpose.msra.mxu0 0
    %320 = vmatprep.subr.bf16.mxu0 0
    %321 = vmatpush1.bf16.xpose.msra.mxu0 0
    %322 = vmatprep.subr.bf16.mxu0 0
    %323 = vmatpush1.bf16.xpose.msra.mxu0 0
    %324 = vmatprep.subr.bf16.mxu0 0
    %325 = vmatpush1.bf16.xpose.msra.mxu0 0
    %326 = vmatprep.subr.bf16.mxu0 0
    %327 = vmatpush1.bf16.xpose.msra.mxu0 0
    %328 = vmatprep.subr.bf16.mxu0 0
    %329 = vmatpush1.bf16.xpose.msra.mxu0 0
    %330 = vmatprep.mubr.bf16.mxu0 0
    %331 = vmatmul.mubr.bf16.gmra.mrb[0].mxu0 %v210
    %v332 = vpop.f32.mrb[0].mxu0
    %v333 = vadd.f32 0.0, %v332
    %v334 = vpop.f32.mrb[0].mxu0
    %v335 = vpop.f32.mrb[0].mxu0
    %v336 = vpop.f32.mrb[0].mxu0
    %337 = vdwg.mxu0
    %v338 = vmul.f32 %v293, 0.17677669
    %v339 = vmul.f32 %v333, 0.17677669
    %v340 = vadd.f32 %v338, %v256
    %v341 = vadd.f32 %v339, %v257
    %vm342 = vcmask 64512
    %v343 = vsel %vm342, %v340, -inf
    %344 = vmax.xlane.f32.xlu0 %v343
    %v345 = vpop.xlane.xlu0 %344
    %v346 = vsel %vm342, %v341, -inf
    %347 = vmax.xlane.f32.xlu0 %v346
    %v348 = vpop.xlane.xlu0 %347
    %v349 = vsub.f32 %v340, %v345
    %v350 = vsub.f32 %v341, %v348
    %v351 = vmul.f32 %v349, 1.442695
    %v352 = vpow.pop %v351
    %v353 = vmul.f32 %v350, 1.442695
    %v354 = vpow.pop %v353
    %v355 = vsel %vm342, %v352, 0.0
    %356 = vadd.xlane.f32.xlu0 %v355
    %v357 = vpop.xlane.xlu0 %356
    %v358 = vsel %vm342, %v354, 0.0
    %359 = vadd.xlane.f32.xlu0 %v358
    %v360 = vpop.xlane.xlu0 %359
    %v361 = vpack.c.bf16 %v352, %v352
    %v362 = vpack.c.bf16 %v354, %v354
    %v364 = vsel %vm342, %v361, 0
    %vm366 = vcmask 1043456
    %v368 = vsel %vm366, %v213, 0
    %370 = vmatprep.subr.bf16.mxu0 0
    %371 = vmatpush1.bf16.msra.mxu0 %v368
    %372 = vmatprep.subr.bf16.mxu0 0
    %373 = vmatpush1.bf16.msra.mxu0 0
    %374 = vmatprep.subr.bf16.mxu0 0
    %375 = vmatpush1.bf16.msra.mxu0 0
    %376 = vmatprep.subr.bf16.mxu0 0
    %377 = vmatpush1.bf16.msra.mxu0 0
    %378 = vmatprep.subr.bf16.mxu0 0
    %379 = vmatpush1.bf16.msra.mxu0 0
    %380 = vmatprep.subr.bf16.mxu0 0
    %381 = vmatpush1.bf16.msra.mxu0 0
    %382 = vmatprep.subr.bf16.mxu0 0
    %383 = vmatpush1.bf16.msra.mxu0 0
    %384 = vmatprep.subr.bf16.mxu0 0
    %385 = vmatpush1.bf16.msra.mxu0 0
    %386 = vmatprep.subr.bf16.mxu0 0
    %387 = vmatpush1.bf16.msra.mxu0 0
    %388 = vmatprep.subr.bf16.mxu0 0
    %389 = vmatpush1.bf16.msra.mxu0 0
    %390 = vmatprep.subr.bf16.mxu0 0
    %391 = vmatpush1.bf16.msra.mxu0 0
    %392 = vmatprep.subr.bf16.mxu0 0
    %393 = vmatpush1.bf16.msra.mxu0 0
    %394 = vmatprep.subr.bf16.mxu0 0
    %395 = vmatpush1.bf16.msra.mxu0 0
    %396 = vmatprep.subr.bf16.mxu0 0
    %397 = vmatpush1.bf16.msra.mxu0 0
    %398 = vmatprep.subr.bf16.mxu0 0
    %399 = vmatpush1.bf16.msra.mxu0 0
    %400 = vmatprep.subr.bf16.mxu0 0
    %401 = vmatpush1.bf16.msra.mxu0 0
    %402 = vmatprep.mubr.bf16.mxu0 0
    %403 = vmatmul.mubr.bf16.gmra.mrb[0].mxu0 %v364
    %v404 = vpop.f32.mrb[0].mxu0
    %v405 = vadd.f32 0.0, %v404
    %v406 = vpop.f32.mrb[0].mxu0
    %v407 = vpop.f32.mrb[0].mxu0
    %v408 = vpop.f32.mrb[0].mxu0
    %409 = vdwg.mxu0
    %v411 = vsel %vm342, %v362, 0
    %v414 = vsel %vm366, %v214, 0
    %416 = vmatprep.subr.bf16.mxu0 0
    %417 = vmatpush1.bf16.msra.mxu0 %v414
    %418 = vmatprep.subr.bf16.mxu0 0
    %419 = vmatpush1.bf16.msra.mxu0 0
    %420 = vmatprep.subr.bf16.mxu0 0
    %421 = vmatpush1.bf16.msra.mxu0 0
    %422 = vmatprep.subr.bf16.mxu0 0
    %423 = vmatpush1.bf16.msra.mxu0 0
    %424 = vmatprep.subr.bf16.mxu0 0
    %425 = vmatpush1.bf16.msra.mxu0 0
    %426 = vmatprep.subr.bf16.mxu0 0
    %427 = vmatpush1.bf16.msra.mxu0 0
    %428 = vmatprep.subr.bf16.mxu0 0
    %429 = vmatpush1.bf16.msra.mxu0 0
    %430 = vmatprep.subr.bf16.mxu0 0
    %431 = vmatpush1.bf16.msra.mxu0 0
    %432 = vmatprep.subr.bf16.mxu0 0
    %433 = vmatpush1.bf16.msra.mxu0 0
    %434 = vmatprep.subr.bf16.mxu0 0
    %435 = vmatpush1.bf16.msra.mxu0 0
    %436 = vmatprep.subr.bf16.mxu0 0
    %437 = vmatpush1.bf16.msra.mxu0 0
    %438 = vmatprep.subr.bf16.mxu0 0
    %439 = vmatpush1.bf16.msra.mxu0 0
    %440 = vmatprep.subr.bf16.mxu0 0
    %441 = vmatpush1.bf16.msra.mxu0 0
    %442 = vmatprep.subr.bf16.mxu0 0
    %443 = vmatpush1.bf16.msra.mxu0 0
    %444 = vmatprep.subr.bf16.mxu0 0
    %445 = vmatpush1.bf16.msra.mxu0 0
    %446 = vmatprep.subr.bf16.mxu0 0
    %447 = vmatpush1.bf16.msra.mxu0 0
    %448 = vmatprep.mubr.bf16.mxu0 0
    %449 = vmatmul.mubr.bf16.gmra.mrb[0].mxu0 %v411
    %v450 = vpop.f32.mrb[0].mxu0
    %v451 = vadd.f32 0.0, %v450
    %v452 = vpop.f32.mrb[0].mxu0
    %v453 = vpop.f32.mrb[0].mxu0
    %v454 = vpop.f32.mrb[0].mxu0
    %455 = vdwg.mxu0
    %v456 = vrcp.pop %v357
    %v457 = vrcp.pop %v360
    %v458 = vmul.f32 %v405, %v456
    %v459 = vmul.f32 %v451, %v457
    %v460 = vpack.c.bf16 %v459, %v458
    %v461 = vld [vmem:[%s4] sm:$0xf]
    %v462 = vld [vmem:[%s4 + $0x4] sm:$0xf]
    %v463 = vld [vmem:[%s4 + $0x8] sm:$0xf]
    %v464 = vld [vmem:[%s4 + $0xc] sm:$0xf]
    %v465 = vld [vmem:[%s4 + $0x10] sm:$0xf]
    %v466 = vld [vmem:[%s4 + $0x14] sm:$0xf]
    %v467 = vld [vmem:[%s4 + $0x18] sm:$0xf]
    %v468 = vld [vmem:[%s4 + $0x1c] sm:$0xf]
    %v469 = vld [vmem:[%s4 + $0x20] sm:$0xf]
    %v470 = vld [vmem:[%s4 + $0x24] sm:$0xf]
    %v471 = vld [vmem:[%s4 + $0x28] sm:$0xf]
    %v472 = vld [vmem:[%s4 + $0x2c] sm:$0xf]
    %v473 = vld [vmem:[%s4 + $0x30] sm:$0xf]
    %v474 = vld [vmem:[%s4 + $0x34] sm:$0xf]
    %v475 = vld [vmem:[%s4 + $0x38] sm:$0xf]
    %v476 = vld [vmem:[%s4 + $0x3c] sm:$0xf]
    %v477 = vld [vmem:[%s5] sm:$0x1]
    %v479 = vlaneseq
    %v480 = vshrl.u32 %v479, 7
    %v481 = vsub.s32 0, %v480
    %v482 = vrot.slane %v477, %v481
    %v500 = vunpack.c.l.b16 %v461
    %v501 = vunpack.c.l.b16 %v462
    %v502 = vunpack.c.l.b16 %v463
    %v503 = vunpack.c.l.b16 %v464
    %v504 = vunpack.c.l.b16 %v465
    %v505 = vunpack.c.l.b16 %v466
    %v506 = vunpack.c.l.b16 %v467
    %v507 = vunpack.c.l.b16 %v468
    %v508 = vunpack.c.l.b16 %v469
    %v509 = vunpack.c.l.b16 %v470
    %v510 = vunpack.c.l.b16 %v471
    %v511 = vunpack.c.l.b16 %v472
    %v512 = vunpack.c.l.b16 %v473
    %v513 = vunpack.c.l.b16 %v474
    %v514 = vunpack.c.l.b16 %v475
    %v515 = vunpack.c.l.b16 %v476
    %v516 = vpack.c.b16 %v501, %v500
    %v517 = vpack.c.b16 %v503, %v502
    %v518 = vpack.c.b16 %v505, %v504
    %v519 = vpack.c.b16 %v507, %v506
    %v520 = vpack.c.b16 %v509, %v508
    %v521 = vpack.c.b16 %v511, %v510
    %v522 = vpack.c.b16 %v513, %v512
    %v523 = vpack.c.b16 %v515, %v514
    %532 = vmatprep.subr.bf16.mxu0 0
    %533 = vmatpush1.bf16.msra.mxu0 %v516
    %534 = vmatprep.subr.bf16.mxu0 0
    %535 = vmatpush1.bf16.msra.mxu0 %v517
    %536 = vmatprep.subr.bf16.mxu0 0
    %537 = vmatpush1.bf16.msra.mxu0 %v518
    %538 = vmatprep.subr.bf16.mxu0 0
    %539 = vmatpush1.bf16.msra.mxu0 %v519
    %540 = vmatprep.subr.bf16.mxu0 0
    %541 = vmatpush1.bf16.msra.mxu0 %v520
    %542 = vmatprep.subr.bf16.mxu0 0
    %543 = vmatpush1.bf16.msra.mxu0 %v521
    %544 = vmatprep.subr.bf16.mxu0 0
    %545 = vmatpush1.bf16.msra.mxu0 %v522
    %546 = vmatprep.subr.bf16.mxu0 0
    %547 = vmatpush1.bf16.msra.mxu0 %v523
    %548 = vmatprep.subr.bf16.mxu0 0
    %549 = vmatpush1.bf16.msra.mxu0 0
    %550 = vmatprep.subr.bf16.mxu0 0
    %551 = vmatpush1.bf16.msra.mxu0 0
    %552 = vmatprep.subr.bf16.mxu0 0
    %553 = vmatpush1.bf16.msra.mxu0 0
    %554 = vmatprep.subr.bf16.mxu0 0
    %555 = vmatpush1.bf16.msra.mxu0 0
    %556 = vmatprep.subr.bf16.mxu0 0
    %557 = vmatpush1.bf16.msra.mxu0 0
    %558 = vmatprep.subr.bf16.mxu0 0
    %559 = vmatpush1.bf16.msra.mxu0 0
    %560 = vmatprep.subr.bf16.mxu0 0
    %561 = vmatpush1.bf16.msra.mxu0 0
    %562 = vmatprep.subr.bf16.mxu0 0
    %563 = vmatpush1.bf16.msra.mxu0 0
    %564 = vmatprep.mubr.bf16.mxu0 0
    %565 = vmatmul.mubr.bf16.gmra.mrb[0].mxu0 %v460
    %v566 = vpop.f32.mrb[0].mxu0
    %v567 = vadd.f32 %v482, %v566
    %v568 = vpop.f32.mrb[0].mxu0
    %v569 = vpop.f32.mrb[0].mxu0
    %v570 = vadd.f32 %v482, %v569
    %v571 = vpop.f32.mrb[0].mxu0
    %572 = vdwg.mxu0
    %v573 = vadd.f32 %v61, %v567
    %v574 = vadd.f32 %v62, %v570
    %v575 = vld [vmem:[%s6] sm:$0x1]
    %v576 = vld [vmem:[%s7] sm:$0x1]
    %v577 = vsel %vm121, %v573, 0.0
    %578 = vadd.xlane.f32.xlu0 %v577
    %v579 = vpop.xlane.xlu0 %578
    %v580 = vsel %vm121, %v574, 0.0
    %581 = vadd.xlane.f32.xlu0 %v580
    %v582 = vpop.xlane.xlu0 %581
    %v583 = vrcp.pop 32.0
    %v584 = vmul.f32 %v579, %v583
    %v585 = vmul.f32 %v582, %v583
    %v586 = vsub.f32 %v573, %v584
    %v587 = vsub.f32 %v574, %v585
    %v588 = vmul.f32 %v586, %v586
    %v589 = vmul.f32 %v587, %v587
    %v590 = vsel %vm121, %v588, 0.0
    %591 = vadd.xlane.f32.xlu0 %v590
    %v592 = vpop.xlane.xlu0 %591
    %v593 = vsel %vm121, %v589, 0.0
    %594 = vadd.xlane.f32.xlu0 %v593
    %v595 = vpop.xlane.xlu0 %594
    %v596 = vmul.f32 %v592, %v583
    %v597 = vmul.f32 %v595, %v583
    %v598 = vadd.f32 %v596, 1e-12
    %v599 = vadd.f32 %v597, 1e-12
    %v600 = vrsqrt.pop %v598
    %v601 = vrsqrt.pop %v599
    %v602 = vmul.f32 %v586, %v600
    %v603 = vmul.f32 %v587, %v601
    %v605 = vlaneseq
    %v606 = vshrl.u32 %v605, 7
    %v607 = vsub.s32 0, %v606
    %v608 = vrot.slane %v575, %v607
    %v610 = vmul.f32 %v602, %v608
    %v611 = vmul.f32 %v603, %v608
    %v613 = vlaneseq
    %v614 = vshrl.u32 %v613, 7
    %v615 = vsub.s32 0, %v614
    %v616 = vrot.slane %v576, %v615
    %v618 = vadd.f32 %v610, %v616
    %v619 = vadd.f32 %v611, %v616
    %v620 = vpack.c.bf16 %v618, %v618
    %v621 = vpack.c.bf16 %v619, %v619
    %v622 = vld [vmem:[%s8] sm:$0xf]
    %v623 = vld [vmem:[%s8 + $0x4] sm:$0xf]
    %v624 = vld [vmem:[%s8 + $0x8] sm:$0xf]
    %v625 = vld [vmem:[%s8 + $0xc] sm:$0xf]
    %v626 = vld [vmem:[%s9] sm:$0x1]
    %v628 = vlaneseq
    %v629 = vshrl.u32 %v628, 7
    %v630 = vsub.s32 0, %v629
    %v631 = vrot.slane %v626, %v630
    %v635 = vunpack.c.l.b16 %v620
    %v636 = vunpack.c.l.b16 %v621
    %v637 = vrot.slane %v636, 7
    %vm638 = vcmask 1041409
    %v639 = vsel %vm638, %v637, %v635
    %v640 = vpack.c.b16 %v639, %v639
    %v645 = vunpack.c.l.b16 %v622
    %v646 = vunpack.c.l.b16 %v623
    %v647 = vunpack.c.l.b16 %v624
    %v648 = vunpack.c.l.b16 %v625
    %v649 = vpack.c.b16 %v646, %v645
    %v650 = vpack.c.b16 %v648, %v647
    %v654 = vsel %vm121, %v640, 0
    %656 = vmatprep.subr.bf16.mxu0 0
    %657 = vmatpush1.bf16.msra.mxu0 %v649
    %658 = vmatprep.subr.bf16.mxu0 0
    %659 = vmatpush1.bf16.msra.mxu0 %v650
    %660 = vmatprep.subr.bf16.mxu0 0
    %661 = vmatpush1.bf16.msra.mxu0 0
    %662 = vmatprep.subr.bf16.mxu0 0
    %663 = vmatpush1.bf16.msra.mxu0 0
    %664 = vmatprep.subr.bf16.mxu0 0
    %665 = vmatpush1.bf16.msra.mxu0 0
    %666 = vmatprep.subr.bf16.mxu0 0
    %667 = vmatpush1.bf16.msra.mxu0 0
    %668 = vmatprep.subr.bf16.mxu0 0
    %669 = vmatpush1.bf16.msra.mxu0 0
    %670 = vmatprep.subr.bf16.mxu0 0
    %671 = vmatpush1.bf16.msra.mxu0 0
    %672 = vmatprep.subr.bf16.mxu0 0
    %673 = vmatpush1.bf16.msra.mxu0 0
    %674 = vmatprep.subr.bf16.mxu0 0
    %675 = vmatpush1.bf16.msra.mxu0 0
    %676 = vmatprep.subr.bf16.mxu0 0
    %677 = vmatpush1.bf16.msra.mxu0 0
    %678 = vmatprep.subr.bf16.mxu0 0
    %679 = vmatpush1.bf16.msra.mxu0 0
    %680 = vmatprep.subr.bf16.mxu0 0
    %681 = vmatpush1.bf16.msra.mxu0 0
    %682 = vmatprep.subr.bf16.mxu0 0
    %683 = vmatpush1.bf16.msra.mxu0 0
    %684 = vmatprep.subr.bf16.mxu0 0
    %685 = vmatpush1.bf16.msra.mxu0 0
    %686 = vmatprep.subr.bf16.mxu0 0
    %687 = vmatpush1.bf16.msra.mxu0 0
    %688 = vmatprep.mubr.bf16.mxu0 0
    %689 = vmatmul.mubr.bf16.gmra.mrb[0].mxu0 %v654
    %v690 = vpop.f32.mrb[0].mxu0
    %v691 = vadd.f32 %v631, %v690
    %v692 = vpop.f32.mrb[0].mxu0
    %v693 = vpop.f32.mrb[0].mxu0
    %v694 = vpop.f32.mrb[0].mxu0
    %695 = vdwg.mxu0
    %v696 = vmul.f32 %v691, %v691
    %v697 = vmul.f32 %v691, %v696
    %v698 = vmul.f32 %v697, 0.044715
    %v699 = vadd.f32 %v691, %v698
    %v700 = vmul.f32 %v699, 0.7978846
    %v701 = vtanh.pop %v700
    %v702 = vadd.f32 %v701, 1.0
    %v703 = vmul.f32 %v702, 0.5
    %v704 = vmul.f32 %v691, %v703
    %v705 = vpack.c.bf16 %v704, %v704
    %v706 = vld [vmem:[%s10] sm:$0xf]
    %v707 = vld [vmem:[%s10 + $0x4] sm:$0xf]
    %v708 = vld [vmem:[%s10 + $0x8] sm:$0xf]
    %v709 = vld [vmem:[%s10 + $0xc] sm:$0xf]
    %v710 = vld [vmem:[%s10 + $0x10] sm:$0xf]
    %v711 = vld [vmem:[%s10 + $0x14] sm:$0xf]
    %v712 = vld [vmem:[%s10 + $0x18] sm:$0xf]
    %v713 = vld [vmem:[%s10 + $0x1c] sm:$0xf]
    %v714 = vld [vmem:[%s10 + $0x20] sm:$0xf]
    %v715 = vld [vmem:[%s10 + $0x24] sm:$0xf]
    %v716 = vld [vmem:[%s10 + $0x28] sm:$0xf]
    %v717 = vld [vmem:[%s10 + $0x2c] sm:$0xf]
    %v718 = vld [vmem:[%s10 + $0x30] sm:$0xf]
    %v719 = vld [vmem:[%s10 + $0x34] sm:$0xf]
    %v720 = vld [vmem:[%s10 + $0x38] sm:$0xf]
    %v721 = vld [vmem:[%s10 + $0x3c] sm:$0xf]
    %v722 = vld [vmem:[%s11] sm:$0x1]
    %v724 = vlaneseq
    %v725 = vshrl.u32 %v724, 7
    %v726 = vsub.s32 0, %v725
    %v727 = vrot.slane %v722, %v726
    %v745 = vunpack.c.l.b16 %v706
    %v746 = vunpack.c.l.b16 %v707
    %v747 = vunpack.c.l.b16 %v708
    %v748 = vunpack.c.l.b16 %v709
    %v749 = vunpack.c.l.b16 %v710
    %v750 = vunpack.c.l.b16 %v711
    %v751 = vunpack.c.l.b16 %v712
    %v752 = vunpack.c.l.b16 %v713
    %v753 = vunpack.c.l.b16 %v714
    %v754 = vunpack.c.l.b16 %v715
    %v755 = vunpack.c.l.b16 %v716
    %v756 = vunpack.c.l.b16 %v717
    %v757 = vunpack.c.l.b16 %v718
    %v758 = vunpack.c.l.b16 %v719
    %v759 = vunpack.c.l.b16 %v720
    %v760 = vunpack.c.l.b16 %v721
    %v761 = vpack.c.b16 %v746, %v745
    %v762 = vpack.c.b16 %v748, %v747
    %v763 = vpack.c.b16 %v750, %v749
    %v764 = vpack.c.b16 %v752, %v751
    %v765 = vpack.c.b16 %v754, %v753
    %v766 = vpack.c.b16 %v756, %v755
    %v767 = vpack.c.b16 %v758, %v757
    %v768 = vpack.c.b16 %v760, %v759
    %777 = vmatprep.subr.bf16.mxu0 0
    %778 = vmatpush1.bf16.msra.mxu0 %v761
    %779 = vmatprep.subr.bf16.mxu0 0
    %780 = vmatpush1.bf16.msra.mxu0 %v762
    %781 = vmatprep.subr.bf16.mxu0 0
    %782 = vmatpush1.bf16.msra.mxu0 %v763
    %783 = vmatprep.subr.bf16.mxu0 0
    %784 = vmatpush1.bf16.msra.mxu0 %v764
    %785 = vmatprep.subr.bf16.mxu0 0
    %786 = vmatpush1.bf16.msra.mxu0 %v765
    %787 = vmatprep.subr.bf16.mxu0 0
    %788 = vmatpush1.bf16.msra.mxu0 %v766
    %789 = vmatprep.subr.bf16.mxu0 0
    %790 = vmatpush1.bf16.msra.mxu0 %v767
    %791 = vmatprep.subr.bf16.mxu0 0
    %792 = vmatpush1.bf16.msra.mxu0 %v768
    %793 = vmatprep.subr.bf16.mxu0 0
    %794 = vmatpush1.bf16.msra.mxu0 0
    %795 = vmatprep.subr.bf16.mxu0 0
    %796 = vmatpush1.bf16.msra.mxu0 0
    %797 = vmatprep.subr.bf16.mxu0 0
    %798 = vmatpush1.bf16.msra.mxu0 0
    %799 = vmatprep.subr.bf16.mxu0 0
    %800 = vmatpush1.bf16.msra.mxu0 0
    %801 = vmatprep.subr.bf16.mxu0 0
    %802 = vmatpush1.bf16.msra.mxu0 0
    %803 = vmatprep.subr.bf16.mxu0 0
    %804 = vmatpush1.bf16.msra.mxu0 0
    %805 = vmatprep.subr.bf16.mxu0 0
    %806 = vmatpush1.bf16.msra.mxu0 0
    %807 = vmatprep.subr.bf16.mxu0 0
    %808 = vmatpush1.bf16.msra.mxu0 0
    %809 = vmatprep.mubr.bf16.mxu0 0
    %810 = vmatmul.mubr.bf16.gmra.mrb[0].mxu0 %v705
    %v811 = vpop.f32.mrb[0].mxu0
    %v812 = vadd.f32 %v727, %v811
    %v813 = vpop.f32.mrb[0].mxu0
    %v814 = vpop.f32.mrb[0].mxu0
    %v815 = vpop.f32.mrb[0].mxu0
    %816 = vdwg.mxu0
    %v818 = vrot.slane %v812, 1
    %v821 = vadd.f32 %v618, %v812
    %v822 = vadd.f32 %v619, %v818
    %v823 = vld [vmem:[%s12] sm:$0x1]
    %v824 = vld [vmem:[%s13] sm:$0x1]
    %v827 = vrot.slane %v822, 7
    %v828 = vsel %vm638, %v827, %v821
    %vm830 = vcmask 254976
    %v831 = vsel %vm830, %v828, 0.0
    %832 = vadd.xlane.f32.xlu0 %v831
    %v833 = vpop.xlane.xlu0 %832
    %v834 = vmul.f32 %v833, %v583
    %v836 = vrot.slane %v834, 1
    %v839 = vsub.f32 %v821, %v834
    %v840 = vsub.f32 %v822, %v836
    %v841 = vmul.f32 %v839, %v839
    %v842 = vmul.f32 %v840, %v840
    %v845 = vrot.slane %v842, 7
    %v846 = vsel %vm638, %v845, %v841
    %v848 = vsel %vm830, %v846, 0.0
    %849 = vadd.xlane.f32.xlu0 %v848
    %v850 = vpop.xlane.xlu0 %849
    %v851 = vmul.f32 %v850, %v583
    %v852 = vadd.f32 %v851, 1e-12
    %v853 = vrsqrt.pop %v852
    %v855 = vrot.slane %v853, 1
    %v858 = vmul.f32 %v839, %v853
    %v859 = vmul.f32 %v840, %v855
    %v861 = vlaneseq
    %v862 = vshrl.u32 %v861, 7
    %v863 = vsub.s32 0, %v862
    %v864 = vrot.slane %v823, %v863
    %v866 = vmul.f32 %v858, %v864
    %v867 = vmul.f32 %v859, %v864
    %v869 = vlaneseq
    %v870 = vshrl.u32 %v869, 7
    %v871 = vsub.s32 0, %v870
    %v872 = vrot.slane %v824, %v871
    %v874 = vadd.f32 %v866, %v872
    %v875 = vadd.f32 %v867, %v872
    %v876 = vpack.c.bf16 %v874, %v874
    %v877 = vpack.c.bf16 %v875, %v875
    %v878 = vld [vmem:[%s14] sm:$0xf]
    %v879 = vld [vmem:[%s14 + $0x4] sm:$0xf]
    %v880 = vld [vmem:[%s14 + $0x8] sm:$0xf]
    %v881 = vld [vmem:[%s14 + $0xc] sm:$0xf]
    %v882 = vld [vmem:[%s15] sm:$0x1]
    %v884 = vlaneseq
    %v885 = vshrl.u32 %v884, 7
    %v886 = vsub.s32 0, %v885
    %v887 = vrot.slane %v882, %v886
    %v891 = vunpack.c.l.b16 %v876
    %v892 = vunpack.c.l.b16 %v877
    %v893 = vrot.slane %v892, 7
    %v894 = vsel %vm638, %v893, %v891
    %v895 = vpack.c.b16 %v894, %v894
    %v900 = vunpack.c.l.b16 %v878
    %v901 = vunpack.c.l.b16 %v879
    %v902 = vunpack.c.l.b16 %v880
    %v903 = vunpack.c.l.b16 %v881
    %v904 = vpack.c.b16 %v901, %v900
    %v905 = vpack.c.b16 %v903, %v902
    %v909 = vsel %vm121, %v895, 0
    %911 = vmatprep.subr.bf16.mxu0 0
    %912 = vmatpush1.bf16.msra.mxu0 %v904
    %913 = vmatprep.subr.bf16.mxu0 0
    %914 = vmatpush1.bf16.msra.mxu0 %v905
    %915 = vmatprep.subr.bf16.mxu0 0
    %916 = vmatpush1.bf16.msra.mxu0 0
    %917 = vmatprep.subr.bf16.mxu0 0
    %918 = vmatpush1.bf16.msra.mxu0 0
    %919 = vmatprep.subr.bf16.mxu0 0
    %920 = vmatpush1.bf16.msra.mxu0 0
    %921 = vmatprep.subr.bf16.mxu0 0
    %922 = vmatpush1.bf16.msra.mxu0 0
    %923 = vmatprep.subr.bf16.mxu0 0
    %924 = vmatpush1.bf16.msra.mxu0 0
    %925 = vmatprep.subr.bf16.mxu0 0
    %926 = vmatpush1.bf16.msra.mxu0 0
    %927 = vmatprep.subr.bf16.mxu0 0
    %928 = vmatpush1.bf16.msra.mxu0 0
    %929 = vmatprep.subr.bf16.mxu0 0
    %930 = vmatpush1.bf16.msra.mxu0 0
    %931 = vmatprep.subr.bf16.mxu0 0
    %932 = vmatpush1.bf16.msra.mxu0 0
    %933 = vmatprep.subr.bf16.mxu0 0
    %934 = vmatpush1.bf16.msra.mxu0 0
    %935 = vmatprep.subr.bf16.mxu0 0
    %936 = vmatpush1.bf16.msra.mxu0 0
    %937 = vmatprep.subr.bf16.mxu0 0
    %938 = vmatpush1.bf16.msra.mxu0 0
    %939 = vmatprep.subr.bf16.mxu0 0
    %940 = vmatpush1.bf16.msra.mxu0 0
    %941 = vmatprep.subr.bf16.mxu0 0
    %942 = vmatpush1.bf16.msra.mxu0 0
    %943 = vmatprep.mubr.bf16.mxu0 0
    %944 = vmatmul.mubr.bf16.gmra.mrb[0].mxu0 %v909
    %v945 = vpop.f32.mrb[0].mxu0
    %v946 = vadd.f32 %v887, %v945
    %v947 = vpop.f32.mrb[0].mxu0
    %v948 = vpop.f32.mrb[0].mxu0
    %v949 = vpop.f32.mrb[0].mxu0
    %950 = vdwg.mxu0
    %v951 = vtanh.pop %v946
    %v952 = vpack.c.bf16 %v951, %v951
    %v953 = vld [vmem:[%s16] sm:$0xf]
    %v954 = vld [vmem:[%s16 + $0x4] sm:$0xf]
    %v955 = vld [vmem:[%s16 + $0x8] sm:$0xf]
    %v956 = vld [vmem:[%s16 + $0xc] sm:$0xf]
    %v957 = vld [vmem:[%s17] sm:$0x1]
    %v959 = vlaneseq
    %v960 = vshrl.u32 %v959, 7
    %v961 = vsub.s32 0, %v960
    %v962 = vrot.slane %v957, %v961
    %v968 = vunpack.c.l.b16 %v953
    %v969 = vunpack.c.l.b16 %v954
    %v970 = vunpack.c.l.b16 %v955
    %v971 = vunpack.c.l.b16 %v956
    %v972 = vpack.c.b16 %v969, %v968
    %v973 = vpack.c.b16 %v971, %v970
    %v977 = vsel %vm121, %v952, 0
    %979 = vmatprep.subr.bf16.mxu0 0
    %980 = vmatpush1.bf16.msra.mxu0 %v972
    %981 = vmatprep.subr.bf16.mxu0 0
    %982 = vmatpush1.bf16.msra.mxu0 %v973
    %983 = vmatprep.subr.bf16.mxu0 0
    %984 = vmatpush1.bf16.msra.mxu0 0
    %985 = vmatprep.subr.bf16.mxu0 0
    %986 = vmatpush1.bf16.msra.mxu0 0
    %987 = vmatprep.subr.bf16.mxu0 0
    %988 = vmatpush1.bf16.msra.mxu0 0
    %989 = vmatprep.subr.bf16.mxu0 0
    %990 = vmatpush1.bf16.msra.mxu0 0
    %991 = vmatprep.subr.bf16.mxu0 0
    %992 = vmatpush1.bf16.msra.mxu0 0
    %993 = vmatprep.subr.bf16.mxu0 0
    %994 = vmatpush1.bf16.msra.mxu0 0
    %995 = vmatprep.subr.bf16.mxu0 0
    %996 = vmatpush1.bf16.msra.mxu0 0
    %997 = vmatprep.subr.bf16.mxu0 0
    %998 = vmatpush1.bf16.msra.mxu0 0
    %999 = vmatprep.subr.bf16.mxu0 0
    %1000 = vmatpush1.bf16.msra.mxu0 0
    %1001 = vmatprep.subr.bf16.mxu0 0
    %1002 = vmatpush1.bf16.msra.mxu0 0
    %1003 = vmatprep.subr.bf16.mxu0 0
    %1004 = vmatpush1.bf16.msra.mxu0 0
    %1005 = vmatprep.subr.bf16.mxu0 0
    %1006 = vmatpush1.bf16.msra.mxu0 0
    %1007 = vmatprep.subr.bf16.mxu0 0
    %1008 = vmatpush1.bf16.msra.mxu0 0
    %1009 = vmatprep.subr.bf16.mxu0 0
    %1010 = vmatpush1.bf16.msra.mxu0 0
    %1011 = vmatprep.mubr.bf16.mxu0 0
    %1012 = vmatmul.mubr.bf16.gmra.mrb[0].mxu0 %v977
    %v1013 = vpop.f32.mrb[0].mxu0
    %v1014 = vadd.f32 %v962, %v1013
    %v1015 = vpop.f32.mrb[0].mxu0
    %v1016 = vpop.f32.mrb[0].mxu0
    %v1017 = vpop.f32.mrb[0].mxu0
    %1018 = vdwg.mxu0
    %1019 = vst [vmem:[#allocation2] sm:$0x3] %v1014
    // Predicated region
    $region74: #{bert_classifier_forward.1} parent=1 // pred_check
      _
    $region75: #{bert_classifier_forward.1} parent=1 // pred_check_branch
      %1021 = sbr.rel (0) target = $region77
    $region76: #{bert_classifier_forward.1} parent=1 // pred_region
      %s1023 = ssub.s32 32, 32
      %1024 = vsyncadd [#allocation3], %s1023
      %s1026 = sshll.u32 [#allocation2], 4
      %s1027 = int_to_ptr.vmem [resolvable:$true] %s1026
      %1029 = dma.vmem_to_hbm [thread:$0]  %s1027, 32, %s18, [#allocation3]
    $region77: #{bert_classifier_forward.1} parent=1 // pred_fallthru
      _
    // Predicated region
    $region78: #{bert_classifier_forward.1} parent=1 // pred_check
      _
    $region79: #{bert_classifier_forward.1} parent=1 // pred_check_branch
      %1031 = sbr.rel (0) target = $region81
    $region80: #{bert_classifier_forward.1} parent=1 // pred_region
      %1032 = dma.done [#allocation3], 32
    $region81: #{bert_classifier_forward.1} parent=1 // pred_fallthru
      _
    %1033 = vsyncpa [#allocation3], 1

</llo_original>
